<compile_context>
chip_gen: v7x
topology: tpu7x:2x2x1
jax: 0.10.0
libtpu: 0.0.40
codegen_flags: <defaults>
</compile_context>

<pallas_src>
import functools

import jax
import jax.numpy as jnp
from jax import lax
from jax.experimental import pallas as pl
from jax.experimental.pallas import tpu as pltpu


def _choose_tq(n):
    """Return (query-tile length, padded sequence length).

    Short / ViT-scale sequences use a single full-length tile (qt grid extent
    of 1).  Long sequences use 256-row tiles (sized for v7x's 64 MiB VMEM,
    also fine on v5e/v6e) and the sequence is padded up to a tile multiple so
    the kernel never silently falls back to a full-(N, N) working set.
    """
    if n <= 512:
        return n, n
    tq = 256
    return tq, ((n + tq - 1) // tq) * tq


def mhsa_kernel(x_ref, wqkv_ref, wout_ref, b_ref, o_ref, qkv_ref, attn_ref, *,
                num_heads, head_dim, tq, n_valid, cdt):
    C = num_heads * head_dim
    n_pad = qkv_ref.shape[0]
    qt = pl.program_id(1)

    # --- Once per batch: fused, full-width QKV projection into VMEM scratch.
    #     (Softmax scale is already folded into the Q columns of wqkv.)
    @pl.when(qt == 0)
    def _():
        x = x_ref[...].astype(cdt)                                  # (n_pad, C)
        qkv_ref[...] = jnp.dot(
            x, wqkv_ref[...],
            preferred_element_type=jnp.float32).astype(cdt)         # (n_pad, 3C)

    q0 = pl.multiple_of(qt * tq, tq)

    # --- Per query tile: per-head attention.  Heads are statically unrolled;
    #     head selection is a static lane slice of the resident QKV scratch.
    for h in range(num_heads):
        lo = h * head_dim
        q_h = qkv_ref[pl.ds(q0, tq), lo:lo + head_dim]              # (tq, D)
        k_h = qkv_ref[:, C + lo:C + lo + head_dim]                  # (n_pad, D)
        v_h = qkv_ref[:, 2 * C + lo:2 * C + lo + head_dim]          # (n_pad, D)

        # Scores: contract the last dims of q and k -> no transpose/relayout.
        s = lax.dot_general(q_h, k_h, (((1,), (1,)), ((), ())),
                            preferred_element_type=jnp.float32)     # (tq, n_pad)
        if n_valid < n_pad:  # static branch: mask padded key columns
            col = lax.broadcasted_iota(jnp.int32, s.shape, 1)
            s = jnp.where(col < n_valid, s, -jnp.inf)

        # Numerically stable softmax statistics in f32.
        m = jnp.max(s, axis=-1, keepdims=True)
        p = jnp.exp(s - m)
        l = jnp.sum(p, axis=-1, keepdims=True)

        # Unnormalized PV matmul, then deferred normalization on the small
        # (tq, D) tile (EUP reciprocal, exact).
        pv = jnp.dot(p.astype(cdt), v_h,
                     preferred_element_type=jnp.float32)            # (tq, D)
        pv = pv * pl.reciprocal(l, approx=False)
        attn_ref[:, lo:lo + head_dim] = pv.astype(cdt)

    # --- Single full-width output projection for the whole tile + bias.
    out = jnp.dot(attn_ref[...], wout_ref[...],
                  preferred_element_type=jnp.float32)               # (tq, C)
    o_ref[...] = (out + b_ref[...]).astype(o_ref.dtype)


def multi_head_self_attention(x, w_qkv, w_out, b_out, num_heads, *,
                              mxu_dtype=None):
    """x: (B, N, C); w_qkv: (3C, C) [torch Linear layout]; w_out: (C, C);
    b_out: (C,).  Matches: qkv = Linear(C, 3C, bias=False); out = Linear(C, C).

    mxu_dtype: optional dtype for MXU operands (e.g. jnp.bfloat16 for f32
    inputs on v5e); accumulation and softmax statistics stay f32.
    """
    B, N, C = x.shape
    H = num_heads
    D = C // H
    scale = float(D) ** -0.5
    cdt = jnp.dtype(x.dtype if mxu_dtype is None else mxu_dtype)

    # Fused projection slab in "x @ W" orientation: columns [0:C]=Q (with the
    # softmax scale folded in), [C:2C]=K, [2C:3C]=V; head h occupies lanes
    # [h*D, (h+1)*D) within each section (the layout torch's reshape implies).
    w_fused = jnp.concatenate(
        [w_qkv[0 * C:1 * C] * scale, w_qkv[1 * C:2 * C], w_qkv[2 * C:3 * C]],
        axis=0).T.astype(cdt)                                       # (C, 3C)
    w_out_t = w_out.T.astype(cdt)                                   # (C, C)
    b2 = b_out.reshape(1, C)

    tq, n_pad = _choose_tq(N)
    num_qt = n_pad // tq
    x_in = x if n_pad == N else jnp.pad(x, ((0, 0), (0, n_pad - N), (0, 0)))

    kernel = functools.partial(mhsa_kernel, num_heads=H, head_dim=D, tq=tq,
                               n_valid=N, cdt=cdt)

    # Explicit scoped-VMEM budget (defaults are only 16/32 MiB): usage is
    # dominated by the x block, the QKV scratch and the f32 score temporaries.
    in_b = jnp.dtype(x.dtype).itemsize
    c_b = jnp.dtype(cdt).itemsize
    vmem_est = (2 * n_pad * C * in_b          # x block (double-buffered)
                + 2 * 4 * C * C * c_b         # resident W_qkv + W_out
                + 2 * tq * C * in_b           # output block
                + 3 * n_pad * C * c_b         # fused QKV scratch
                + tq * C * c_b                # attention-output scratch
                + 6 * tq * n_pad * 4)         # f32 score/exp temporaries
    vmem_limit = int(min(max(vmem_est * 5 // 4, 32 << 20), 100 << 20))

    out = pl.pallas_call(
        kernel,
        out_shape=jax.ShapeDtypeStruct((B, n_pad, C), x.dtype),
        grid_spec=pltpu.PrefetchScalarGridSpec(
            num_scalar_prefetch=0,
            grid=(B, num_qt),
            in_specs=[
                # x: one block per batch, constant across query tiles.
                # TODO(synk): single-buffer this block (largest VMEM resident
                # at long N) once a 1-deep pipeline_mode is worth it.
                pl.BlockSpec((None, n_pad, C), lambda b, qt: (b, 0, 0)),
                # Weights / bias: constant block index -> DMA'd once, resident.
                pl.BlockSpec((C, 3 * C), lambda b, qt: (0, 0)),
                pl.BlockSpec((C, C), lambda b, qt: (0, 0)),
                pl.BlockSpec((1, C), lambda b, qt: (0, 0)),
            ],
            out_specs=pl.BlockSpec((None, tq, C), lambda b, qt: (b, qt, 0)),
            scratch_shapes=[
                pltpu.VMEM((n_pad, 3 * C), cdt),   # fused Q|K|V, all heads
                pltpu.VMEM((tq, C), cdt),          # assembled attention output
            ],
        ),
        compiler_params=pltpu.CompilerParams(
            # qt must stay "arbitrary": the QKV scratch is filled at qt == 0
            # and reused by later query tiles of the same batch.
            dimension_semantics=("parallel", "arbitrary"),
            vmem_limit_bytes=vmem_limit),
    )(x_in, w_fused, w_out_t, b2)

    return out if n_pad == N else out[:, :N, :]


def reference_mhsa(x, w_qkv, w_out, b_out, num_heads):
    B, N, C = x.shape
    D = C // num_heads
    scale = float(D) ** -0.5
    qkv = x @ w_qkv.T                                    # (B, N, 3C)
    qkv = qkv.reshape(B, N, 3, num_heads, D).transpose(2, 0, 3, 1, 4)
    q, k, v = qkv[0], qkv[1], qkv[2]                     # (B, H, N, D)
    scores = jnp.einsum('bhnd,bhmd->bhnm', q, k) * scale
    w = jax.nn.softmax(scores, axis=-1)
    o = jnp.einsum('bhnm,bhmd->bhnd', w, v)              # (B, H, N, D)
    o = o.transpose(0, 2, 1, 3).reshape(B, N, C)
    return o @ w_out.T + b_out


if __name__ == "__main__":
    B, N, C, H = 2, 8, 32, 4  # batch, seq, embed_dim, num_heads

    key = jax.random.PRNGKey(0)
    kx, kqkv, kwo, kbo = jax.random.split(key, 4)

    x = jax.random.normal(kx, (B, N, C), dtype=jnp.float32)
    # Deterministic synthetic parameters (shapes match nn.Linear in __init__).
    w_qkv = jax.random.normal(kqkv, (3 * C, C), dtype=jnp.float32) * (C ** -0.5)
    w_out = jax.random.normal(kwo, (C, C), dtype=jnp.float32) * (C ** -0.5)
    b_out = jax.random.normal(kbo, (C,), dtype=jnp.float32) * 0.01

    ref = reference_mhsa(x, w_qkv, w_out, b_out, H)

    # Default path: MXU operands keep the input dtype (f32 here).
    out = multi_head_self_attention(x, w_qkv, w_out, b_out, H)
    out = jax.block_until_ready(out)
    assert out.shape == (B, N, C)
    assert jnp.allclose(out, ref, atol=1e-2, rtol=1e-2), "mismatch (f32 path)"

    # bf16 MXU-operand path (recommended on v5e for f32 inputs); f32 accum and
    # f32 softmax statistics are kept, so only a small precision drop.
    out_bf16 = multi_head_self_attention(x, w_qkv, w_out, b_out, H,
                                         mxu_dtype=jnp.bfloat16)
    out_bf16 = jax.block_until_ready(out_bf16)
    assert out_bf16.shape == (B, N, C)
    assert jnp.allclose(out_bf16, ref, atol=1e-1, rtol=1e-1), "mismatch (bf16 path)"

    print("KERNEL_OK")
</pallas_src>

<mosaic_0001>
module attributes {stable_mosaic.version = 11 : i64} {
  func.func @mhsa_kernel(%arg0: i32, %arg1: i32, %arg2: memref<1x8x32xf32, #tpu.memory_space<vmem>>, %arg3: memref<32x96xf32, #tpu.memory_space<vmem>>, %arg4: memref<32x32xf32, #tpu.memory_space<vmem>>, %arg5: memref<1x32xf32, #tpu.memory_space<vmem>>, %arg6: memref<1x8x32xf32, #tpu.memory_space<vmem>>, %arg7: memref<8x96xf32, #tpu.memory_space<vmem>>, %arg8: memref<8x32xf32, #tpu.memory_space<vmem>>) attributes {dimension_semantics = [#tpu.dimension_semantics<parallel>, #tpu.dimension_semantics<arbitrary>], iteration_bounds = array<i64: 2, 1>, scalar_prefetch = 0 : i64, scratch_operands = 2 : i64, tpu.core_type = #tpu.core_type<tc>, window_params = [{transform_indices = @transform_0, window_bounds = array<i64: 1, 8, 32>}, {pipeline_mode = #tpu.pipeline_mode<synchronous>, transform_indices = @transform_1, window_bounds = array<i64: 32, 96>}, {pipeline_mode = #tpu.pipeline_mode<synchronous>, transform_indices = @transform_2, window_bounds = array<i64: 32, 32>}, {pipeline_mode = #tpu.pipeline_mode<synchronous>, transform_indices = @transform_3, window_bounds = array<i64: 1, 32>}, {transform_indices = @transform_4, window_bounds = array<i64: 1, 8, 32>}]} {
    %c0_i32 = arith.constant 0 : i32
    %0 = arith.cmpi eq, %arg1, %c0_i32 : i32
    %1 = arith.extui %0 : i1 to i32
    %c0_i32_0 = arith.constant 0 : i32
    %2 = arith.cmpi ne, %1, %c0_i32_0 : i32
    scf.if %2 {
      %c0_42 = arith.constant 0 : index
      %c0_43 = arith.constant 0 : index
      %c0_44 = arith.constant 0 : index
      %82 = vector.load %arg2[%c0_42, %c0_43, %c0_44] : memref<1x8x32xf32, #tpu.memory_space<vmem>>, vector<1x8x32xf32>
      %83 = vector.shape_cast %82 : vector<1x8x32xf32> to vector<8x32xf32>
      %c0_45 = arith.constant 0 : index
      %c0_46 = arith.constant 0 : index
      %84 = vector.load %arg3[%c0_45, %c0_46] : memref<32x96xf32, #tpu.memory_space<vmem>>, vector<32x96xf32>
      %cst_47 = arith.constant dense<0.000000e+00> : vector<8x96xf32>
      %85 = tpu.matmul %83, %84, %cst_47 {dimension_numbers = #tpu.dot_dimension_numbers<[1], [0], [0], [1], [0, 0, 1, 1], [], []>} : vector<8x32xf32>, vector<32x96xf32>, vector<8x96xf32> -> vector<8x96xf32>
      %c0_48 = arith.constant 0 : index
      %c0_49 = arith.constant 0 : index
      %86 = vector.load %arg7[%c0_48, %c0_49] : memref<8x96xf32, #tpu.memory_space<vmem>>, vector<8x96xf32>
      tpu.vector_store %arg7[%c0_48, %c0_49], %85 {strides = array<i32>} : memref<8x96xf32, #tpu.memory_space<vmem>>, vector<8x96xf32>,
    } else {
    }
    %c8_i32 = arith.constant 8 : i32
    %3 = arith.muli %arg1, %c8_i32 : i32
    %4 = tpu.assume_multiple %3, 8 : i32
    %5 = arith.index_cast %4 : i32 to index
    %c0 = arith.constant 0 : index
    %6 = vector.load %arg7[%5, %c0] : memref<8x96xf32, #tpu.memory_space<vmem>>, vector<8x8xf32>
    %c0_1 = arith.constant 0 : index
    %c32 = arith.constant 32 : index
    %7 = vector.load %arg7[%c0_1, %c32] : memref<8x96xf32, #tpu.memory_space<vmem>>, vector<8x8xf32>
    %c0_2 = arith.constant 0 : index
    %c64 = arith.constant 64 : index
    %8 = vector.load %arg7[%c0_2, %c64] : memref<8x96xf32, #tpu.memory_space<vmem>>, vector<8x8xf32>
    %cst = arith.constant dense<0.000000e+00> : vector<8x8xf32>
    %9 = tpu.matmul %6, %7, %cst {dimension_numbers = #tpu.dot_dimension_numbers<[1], [1], [0], [0], [0, 0, 1, 0], [], []>} : vector<8x8xf32>, vector<8x8xf32>, vector<8x8xf32> -> vector<8x8xf32>
    %cst_3 = arith.constant dense<0xFF800000> : vector<8xf32>
    %10 = vector.multi_reduction <maximumf>, %9, %cst_3 [1] : vector<8x8xf32> to vector<8xf32>
    %11 = vector.shape_cast %10 : vector<8xf32> to vector<8x1xf32>
    %12 = vector.broadcast %11 : vector<8x1xf32> to vector<8x8xf32>
    %13 = arith.subf %9, %12 : vector<8x8xf32>
    %14 = math.exp %13 : vector<8x8xf32>
    %cst_4 = arith.constant dense<0.000000e+00> : vector<8xf32>
    %15 = vector.multi_reduction <add>, %14, %cst_4 [1] : vector<8x8xf32> to vector<8xf32>
    %16 = vector.shape_cast %15 : vector<8xf32> to vector<8x1xf32>
    %cst_5 = arith.constant dense<0.000000e+00> : vector<8x8xf32>
    %17 = tpu.matmul %14, %8, %cst_5 {dimension_numbers = #tpu.dot_dimension_numbers<[1], [0], [0], [1], [0, 0, 1, 1], [], []>} : vector<8x8xf32>, vector<8x8xf32>, vector<8x8xf32> -> vector<8x8xf32>
    %18 = tpu.reciprocal %16 : vector<8x1xf32> -> vector<8x1xf32>
    %19 = vector.broadcast %18 : vector<8x1xf32> to vector<8x8xf32>
    %20 = arith.mulf %17, %19 : vector<8x8xf32>
    %c0_6 = arith.constant 0 : index
    %c0_7 = arith.constant 0 : index
    %21 = vector.load %arg8[%c0_6, %c0_7] : memref<8x32xf32, #tpu.memory_space<vmem>>, vector<8x8xf32>
    tpu.vector_store %arg8[%c0_6, %c0_7], %20 {strides = array<i32>} : memref<8x32xf32, #tpu.memory_space<vmem>>, vector<8x8xf32>,
    %22 = arith.index_cast %4 : i32 to index
    %c8 = arith.constant 8 : index
    %23 = vector.load %arg7[%22, %c8] : memref<8x96xf32, #tpu.memory_space<vmem>>, vector<8x8xf32>
    %c0_8 = arith.constant 0 : index
    %c40 = arith.constant 40 : index
    %24 = vector.load %arg7[%c0_8, %c40] : memref<8x96xf32, #tpu.memory_space<vmem>>, vector<8x8xf32>
    %c0_9 = arith.constant 0 : index
    %c72 = arith.constant 72 : index
    %25 = vector.load %arg7[%c0_9, %c72] : memref<8x96xf32, #tpu.memory_space<vmem>>, vector<8x8xf32>
    %cst_10 = arith.constant dense<0.000000e+00> : vector<8x8xf32>
    %26 = tpu.matmul %23, %24, %cst_10 {dimension_numbers = #tpu.dot_dimension_numbers<[1], [1], [0], [0], [0, 0, 1, 0], [], []>} : vector<8x8xf32>, vector<8x8xf32>, vector<8x8xf32> -> vector<8x8xf32>
    %cst_11 = arith.constant dense<0xFF800000> : vector<8xf32>
    %27 = vector.multi_reduction <maximumf>, %26, %cst_11 [1] : vector<8x8xf32> to vector<8xf32>
    %28 = vector.shape_cast %27 : vector<8xf32> to vector<8x1xf32>
    %29 = vector.broadcast %28 : vector<8x1xf32> to vector<8x8xf32>
    %30 = arith.subf %26, %29 : vector<8x8xf32>
    %31 = math.exp %30 : vector<8x8xf32>
    %cst_12 = arith.constant dense<0.000000e+00> : vector<8xf32>
    %32 = vector.multi_reduction <add>, %31, %cst_12 [1] : vector<8x8xf32> to vector<8xf32>
    %33 = vector.shape_cast %32 : vector<8xf32> to vector<8x1xf32>
    %cst_13 = arith.constant dense<0.000000e+00> : vector<8x8xf32>
    %34 = tpu.matmul %31, %25, %cst_13 {dimension_numbers = #tpu.dot_dimension_numbers<[1], [0], [0], [1], [0, 0, 1, 1], [], []>} : vector<8x8xf32>, vector<8x8xf32>, vector<8x8xf32> -> vector<8x8xf32>
    %35 = tpu.reciprocal %33 : vector<8x1xf32> -> vector<8x1xf32>
    %36 = vector.broadcast %35 : vector<8x1xf32> to vector<8x8xf32>
    %37 = arith.mulf %34, %36 : vector<8x8xf32>
    %c0_14 = arith.constant 0 : index
    %c8_15 = arith.constant 8 : index
    %38 = vector.load %arg8[%c0_14, %c8_15] : memref<8x32xf32, #tpu.memory_space<vmem>>, vector<8x8xf32>
    tpu.vector_store %arg8[%c0_14, %c8_15], %37 {strides = array<i32>} : memref<8x32xf32, #tpu.memory_space<vmem>>, vector<8x8xf32>,
    %39 = arith.index_cast %4 : i32 to index
    %c16 = arith.constant 16 : index
    %40 = vector.load %arg7[%39, %c16] : memref<8x96xf32, #tpu.memory_space<vmem>>, vector<8x8xf32>
    %c0_16 = arith.constant 0 : index
    %c48 = arith.constant 48 : index
    %41 = vector.load %arg7[%c0_16, %c48] : memref<8x96xf32, #tpu.memory_space<vmem>>, vector<8x8xf32>
    %c0_17 = arith.constant 0 : index
    %c80 = arith.constant 80 : index
    %42 = vector.load %arg7[%c0_17, %c80] : memref<8x96xf32, #tpu.memory_space<vmem>>, vector<8x8xf32>
    %cst_18 = arith.constant dense<0.000000e+00> : vector<8x8xf32>
    %43 = tpu.matmul %40, %41, %cst_18 {dimension_numbers = #tpu.dot_dimension_numbers<[1], [1], [0], [0], [0, 0, 1, 0], [], []>} : vector<8x8xf32>, vector<8x8xf32>, vector<8x8xf32> -> vector<8x8xf32>
    %cst_19 = arith.constant dense<0xFF800000> : vector<8xf32>
    %44 = vector.multi_reduction <maximumf>, %43, %cst_19 [1] : vector<8x8xf32> to vector<8xf32>
    %45 = vector.shape_cast %44 : vector<8xf32> to vector<8x1xf32>
    %46 = vector.broadcast %45 : vector<8x1xf32> to vector<8x8xf32>
    %47 = arith.subf %43, %46 : vector<8x8xf32>
    %48 = math.exp %47 : vector<8x8xf32>
    %cst_20 = arith.constant dense<0.000000e+00> : vector<8xf32>
    %49 = vector.multi_reduction <add>, %48, %cst_20 [1] : vector<8x8xf32> to vector<8xf32>
    %50 = vector.shape_cast %49 : vector<8xf32> to vector<8x1xf32>
    %cst_21 = arith.constant dense<0.000000e+00> : vector<8x8xf32>
    %51 = tpu.matmul %48, %42, %cst_21 {dimension_numbers = #tpu.dot_dimension_numbers<[1], [0], [0], [1], [0, 0, 1, 1], [], []>} : vector<8x8xf32>, vector<8x8xf32>, vector<8x8xf32> -> vector<8x8xf32>
    %52 = tpu.reciprocal %50 : vector<8x1xf32> -> vector<8x1xf32>
    %53 = vector.broadcast %52 : vector<8x1xf32> to vector<8x8xf32>
    %54 = arith.mulf %51, %53 : vector<8x8xf32>
    %c0_22 = arith.constant 0 : index
    %c16_23 = arith.constant 16 : index
    %55 = vector.load %arg8[%c0_22, %c16_23] : memref<8x32xf32, #tpu.memory_space<vmem>>, vector<8x8xf32>
    tpu.vector_store %arg8[%c0_22, %c16_23], %54 {strides = array<i32>} : memref<8x32xf32, #tpu.memory_space<vmem>>, vector<8x8xf32>,
    %56 = arith.index_cast %4 : i32 to index
    %c24 = arith.constant 24 : index
    %57 = vector.load %arg7[%56, %c24] : memref<8x96xf32, #tpu.memory_space<vmem>>, vector<8x8xf32>
    %c0_24 = arith.constant 0 : index
    %c56 = arith.constant 56 : index
    %58 = vector.load %arg7[%c0_24, %c56] : memref<8x96xf32, #tpu.memory_space<vmem>>, vector<8x8xf32>
    %c0_25 = arith.constant 0 : index
    %c88 = arith.constant 88 : index
    %59 = vector.load %arg7[%c0_25, %c88] : memref<8x96xf32, #tpu.memory_space<vmem>>, vector<8x8xf32>
    %cst_26 = arith.constant dense<0.000000e+00> : vector<8x8xf32>
    %60 = tpu.matmul %57, %58, %cst_26 {dimension_numbers = #tpu.dot_dimension_numbers<[1], [1], [0], [0], [0, 0, 1, 0], [], []>} : vector<8x8xf32>, vector<8x8xf32>, vector<8x8xf32> -> vector<8x8xf32>
    %cst_27 = arith.constant dense<0xFF800000> : vector<8xf32>
    %61 = vector.multi_reduction <maximumf>, %60, %cst_27 [1] : vector<8x8xf32> to vector<8xf32>
    %62 = vector.shape_cast %61 : vector<8xf32> to vector<8x1xf32>
    %63 = vector.broadcast %62 : vector<8x1xf32> to vector<8x8xf32>
    %64 = arith.subf %60, %63 : vector<8x8xf32>
    %65 = math.exp %64 : vector<8x8xf32>
    %cst_28 = arith.constant dense<0.000000e+00> : vector<8xf32>
    %66 = vector.multi_reduction <add>, %65, %cst_28 [1] : vector<8x8xf32> to vector<8xf32>
    %67 = vector.shape_cast %66 : vector<8xf32> to vector<8x1xf32>
    %cst_29 = arith.constant dense<0.000000e+00> : vector<8x8xf32>
    %68 = tpu.matmul %65, %59, %cst_29 {dimension_numbers = #tpu.dot_dimension_numbers<[1], [0], [0], [1], [0, 0, 1, 1], [], []>} : vector<8x8xf32>, vector<8x8xf32>, vector<8x8xf32> -> vector<8x8xf32>
    %69 = tpu.reciprocal %67 : vector<8x1xf32> -> vector<8x1xf32>
    %70 = vector.broadcast %69 : vector<8x1xf32> to vector<8x8xf32>
    %71 = arith.mulf %68, %70 : vector<8x8xf32>
    %c0_30 = arith.constant 0 : index
    %c24_31 = arith.constant 24 : index
    %72 = vector.load %arg8[%c0_30, %c24_31] : memref<8x32xf32, #tpu.memory_space<vmem>>, vector<8x8xf32>
    tpu.vector_store %arg8[%c0_30, %c24_31], %71 {strides = array<i32>} : memref<8x32xf32, #tpu.memory_space<vmem>>, vector<8x8xf32>,
    %c0_32 = arith.constant 0 : index
    %c0_33 = arith.constant 0 : index
    %73 = vector.load %arg8[%c0_32, %c0_33] : memref<8x32xf32, #tpu.memory_space<vmem>>, vector<8x32xf32>
    %c0_34 = arith.constant 0 : index
    %c0_35 = arith.constant 0 : index
    %74 = vector.load %arg4[%c0_34, %c0_35] : memref<32x32xf32, #tpu.memory_space<vmem>>, vector<32x32xf32>
    %cst_36 = arith.constant dense<0.000000e+00> : vector<8x32xf32>
    %75 = tpu.matmul %73, %74, %cst_36 {dimension_numbers = #tpu.dot_dimension_numbers<[1], [0], [0], [1], [0, 0, 1, 1], [], []>} : vector<8x32xf32>, vector<32x32xf32>, vector<8x32xf32> -> vector<8x32xf32>
    %c0_37 = arith.constant 0 : index
    %c0_38 = arith.constant 0 : index
    %76 = vector.load %arg5[%c0_37, %c0_38] : memref<1x32xf32, #tpu.memory_space<vmem>>, vector<1x32xf32>
    %77 = vector.broadcast %76 : vector<1x32xf32> to vector<8x32xf32>
    %78 = arith.addf %75, %77 : vector<8x32xf32>
    %c0_39 = arith.constant 0 : index
    %c0_40 = arith.constant 0 : index
    %c0_41 = arith.constant 0 : index
    %79 = vector.load %arg6[%c0_39, %c0_40, %c0_41] : memref<1x8x32xf32, #tpu.memory_space<vmem>>, vector<1x8x32xf32>
    %80 = vector.shape_cast %79 : vector<1x8x32xf32> to vector<8x32xf32>
    %81 = vector.shape_cast %78 : vector<8x32xf32> to vector<1x8x32xf32>
    tpu.vector_store %arg6[%c0_39, %c0_40, %c0_41], %81 {strides = array<i32>} : memref<1x8x32xf32, #tpu.memory_space<vmem>>, vector<1x8x32xf32>,
    return
  }
  func.func @transform_0(%arg0: i32, %arg1: i32) -> (i32, i32, i32) {
    %c0_i32 = arith.constant 0 : i32
    %c0_i32_0 = arith.constant 0 : i32
    %c0_i32_1 = arith.constant 0 : i32
    return %arg0, %c0_i32, %c0_i32_0 : i32, i32, i32
  }
  func.func @transform_1(%arg0: i32, %arg1: i32) -> (i32, i32) {
    %c0_i32 = arith.constant 0 : i32
    %c0_i32_0 = arith.constant 0 : i32
    %c0_i32_1 = arith.constant 0 : i32
    return %c0_i32, %c0_i32_0 : i32, i32
  }
  func.func @transform_2(%arg0: i32, %arg1: i32) -> (i32, i32) {
    %c0_i32 = arith.constant 0 : i32
    %c0_i32_0 = arith.constant 0 : i32
    %c0_i32_1 = arith.constant 0 : i32
    return %c0_i32, %c0_i32_0 : i32, i32
  }
  func.func @transform_3(%arg0: i32, %arg1: i32) -> (i32, i32) {
    %c0_i32 = arith.constant 0 : i32
    %c0_i32_0 = arith.constant 0 : i32
    %c0_i32_1 = arith.constant 0 : i32
    return %c0_i32, %c0_i32_0 : i32, i32
  }
  func.func @transform_4(%arg0: i32, %arg1: i32) -> (i32, i32, i32) {
    %c0_i32 = arith.constant 0 : i32
    %c0_i32_0 = arith.constant 0 : i32
    return %arg0, %arg1, %c0_i32 : i32, i32, i32
  }
}

</mosaic_0001>

<llo_original>
// kernel: tpu_custom_call.1
$region0: #{tpu_custom_call.1}
  #allocation0 [shape = 'u32[]', space=smem, size = 0x4, offset = 0x4, fixed_abs, tag = 'smem constant byte address 0x4 - core index']
  #allocation1 [shape = 'u32[144,128]{1,0:T(1,128)}', space=vmem, size = 0x12000, scoped, tag = 'internal scratch']
  #allocation2 [shape = 'f32[8,96]{1,0:T(8,128)}', space=vmem, size = 0x1000, scoped, tag = 'scratch operand']
  #allocation3 [shape = 'f32[8,32]{1,0:T(8,128)}', space=vmem, size = 0x1000, scoped, tag = 'scratch operand']
  %s0 = inlined_call_operand.hbm [shape: f32[2,8,32], index: 0, kind: input, shape index: {}]
  %s1 = inlined_call_operand.hbm [shape: f32[32,96], index: 1, kind: input, shape index: {}]
  %s2 = inlined_call_operand.hbm [shape: f32[32,32], index: 2, kind: input, shape index: {}]
  %s3 = inlined_call_operand.vmem [shape: f32[1,32], index: 3, kind: input, shape index: {}]
  %s4 = inlined_call_operand.hbm [shape: f32[2,8,32], index: 4, kind: output, shape index: {}]
  %s5 = sld [smem:[#allocation0]]
  $region65: #{tpu_custom_call.1} parent=0
    _
  %s7 = ssub.s32 1, %s5
  %s8 = scalar_select 0, %s7, %s5
  $region1: #{tpu_custom_call.1} parent=0
    #allocation4 [shape = 'u8[8192]{0}', space=vmem, size = 0x2000, scoped, tag = 'input window, operand 0']
    #allocation5 [shape = 's32[2]{0}', space=sflag, size = 0x8, scoped, tag = 'scoped memory for tpu_custom_call.1']
    #allocation6 [shape = 's32[2]{0}', space=sflag, size = 0x8, scoped, tag = 'scoped memory for tpu_custom_call.1']
    #allocation7 [shape = 'u8[16384]{0}', space=vmem, size = 0x4000, scoped, tag = 'input window, operand 1, single buffered']
    #allocation8 [shape = 's32[1]{0}', space=sflag, size = 0x4, scoped, tag = 'scoped memory for tpu_custom_call.1']
    #allocation9 [shape = 'u8[16384]{0}', space=vmem, size = 0x4000, scoped, tag = 'input window, operand 2, single buffered']
    #allocation10 [shape = 'u8[8192]{0}', space=vmem, size = 0x2000, scoped, tag = 'output window, operand 0']
    %9 = vsyncpa [#allocation5], 0
    %s10 = scalar_lea.sflag [#allocation5], 1
    %11 = vsyncpa %s10, 0
    %12 = vsyncpa [#allocation8], 0
    %13 = vsyncpa [#allocation6], 0
    %s14 = scalar_lea.sflag [#allocation6], 1
    %15 = vsyncpa %s14, 0
    loop: start=0, step=1, limit=4
    $region2: #{tpu_custom_call.1} parent=1 // loop_pre_header
      _
    $region3: #{tpu_custom_call.1} parent=1 // loop_header
      %s17 = sphi 0, %s21
      %p18 = scmp.ge.s32.totalorder %s17, 4
      %s24 = sphi 0, %s36
      %s25 = sphi 0, %s32
      %s26 = sphi 0, %s24
      %s27 = sphi 0, %s25
      %s28 = sphi 0, %s26
      %s29 = sphi 0, %s27
      %s39 = sphi 0, %s41
      %s42 = sphi 0, %s39
      %s43 = sphi 0, %s42
      %s59 = sphi 0, %s43
      %s63 = sphi 0, %s63
      %s65 = sphi 0, %s63
      %s66 = sphi 0, %s65
      %s80 = sphi 0, %s66
      %s84 = sphi 0, %s84
      %s86 = sphi 0, %s84
      %s87 = sphi 0, %s86
      %s101 = sphi 0, %s87
      %s105 = sphi 0, %s105
      %s107 = sphi 0, %s105
      %s108 = sphi 0, %s107
      %s122 = sphi 0, %s108
      %s130 = sphi 0, %s132
      %s133 = sphi 0, %s130
      %s134 = sphi 0, %s133
      %s150 = sphi 0, %s134
    $region4: #{tpu_custom_call.1} parent=1 // loop_header_branch
      %20 = sbr.rel (%p18) target = $region8
    $region5: #{tpu_custom_call.1} parent=1 // loop_body
      %s22 = ssub.s32 %s17, 1
      %s23 = ssub.s32 %s17, 2
      %s30 = sadd.s32 1, %s25
      %p31 = scmp.ge.s32.totalorder %s30, 1
      %s32 = scalar_select %p31, 0, %s30
      %s33 = sadd.s32 1, %s24
      %s34 = scalar_select %p31, %s33, %s24
      %p35 = scmp.ge.s32.totalorder %s34, 2
      %s36 = scalar_select %p35, 0, %s34
      %s37 = ssub.s32 %s24, %s36
      %p38 = scmp.eq.s32.totalorder %s37, 0
      %s40 = sadd.s32 %s39, 1
      %s41 = scalar_select %p38, %s39, %s40
      %p44 = pneg %p38
      %p45 = scmp.eq.s32.totalorder %s17, 1
      %p46 = por %p44, %p45
      %p47 = scmp.ne.s32.totalorder %s39, %s42
      %p48 = scmp.eq.s32.totalorder %s17, 0
      %p49 = por %p47, %p48
      %p50 = scmp.ne.s32.totalorder %s39, %s42
      %p51 = scmp.eq.s32.totalorder %s22, 1
      %p52 = por %p50, %p51
      %p53 = scmp.ne.s32.totalorder %s42, %s43
      %p54 = scmp.eq.s32.totalorder %s22, 0
      %p55 = por %p53, %p54
      %p56 = scmp.ne.s32.totalorder %s42, %s43
      %p57 = scmp.eq.s32.totalorder %s23, 1
      %p58 = por %p56, %p57
      %p60 = scmp.ne.s32.totalorder %s43, %s59
      %p61 = scmp.eq.s32.totalorder %s23, 0
      %p62 = por %p60, %p61
      %s64 = sadd.s32 %s63, 1
      %p67 = scmp.eq.s32.totalorder %s17, 1
      %p68 = scmp.ne.s32.totalorder %s63, %s65
      %p69 = scmp.eq.s32.totalorder %s17, 0
      %p70 = por %p68, %p69
      %p71 = scmp.ne.s32.totalorder %s63, %s65
      %p72 = scmp.eq.s32.totalorder %s22, 1
      %p73 = por %p71, %p72
      %p74 = scmp.ne.s32.totalorder %s65, %s66
      %p75 = scmp.eq.s32.totalorder %s22, 0
      %p76 = por %p74, %p75
      %p77 = scmp.ne.s32.totalorder %s65, %s66
      %p78 = scmp.eq.s32.totalorder %s23, 1
      %p79 = por %p77, %p78
      %p81 = scmp.ne.s32.totalorder %s66, %s80
      %p82 = scmp.eq.s32.totalorder %s23, 0
      %p83 = por %p81, %p82
      %s85 = sadd.s32 %s84, 1
      %p88 = scmp.eq.s32.totalorder %s17, 1
      %p89 = scmp.ne.s32.totalorder %s84, %s86
      %p90 = scmp.eq.s32.totalorder %s17, 0
      %p91 = por %p89, %p90
      %p92 = scmp.ne.s32.totalorder %s84, %s86
      %p93 = scmp.eq.s32.totalorder %s22, 1
      %p94 = por %p92, %p93
      %p95 = scmp.ne.s32.totalorder %s86, %s87
      %p96 = scmp.eq.s32.totalorder %s22, 0
      %p97 = por %p95, %p96
      %p98 = scmp.ne.s32.totalorder %s86, %s87
      %p99 = scmp.eq.s32.totalorder %s23, 1
      %p100 = por %p98, %p99
      %p102 = scmp.ne.s32.totalorder %s87, %s101
      %p103 = scmp.eq.s32.totalorder %s23, 0
      %p104 = por %p102, %p103
      %s106 = sadd.s32 %s105, 1
      %p109 = scmp.eq.s32.totalorder %s17, 1
      %p110 = scmp.ne.s32.totalorder %s105, %s107
      %p111 = scmp.eq.s32.totalorder %s17, 0
      %p112 = por %p110, %p111
      %p113 = scmp.ne.s32.totalorder %s105, %s107
      %p114 = scmp.eq.s32.totalorder %s22, 1
      %p115 = por %p113, %p114
      %p116 = scmp.ne.s32.totalorder %s107, %s108
      %p117 = scmp.eq.s32.totalorder %s22, 0
      %p118 = por %p116, %p117
      %p119 = scmp.ne.s32.totalorder %s107, %s108
      %p120 = scmp.eq.s32.totalorder %s23, 1
      %p121 = por %p119, %p120
      %p123 = scmp.ne.s32.totalorder %s108, %s122
      %p124 = scmp.eq.s32.totalorder %s23, 0
      %p125 = por %p123, %p124
      %s126 = ssub.s32 %s24, %s36
      %s127 = ssub.s32 %s25, %s32
      %s128 = sor.u32 %s126, %s127
      %p129 = scmp.eq.s32.totalorder %s128, 0
      %s131 = sadd.s32 %s130, 1
      %s132 = scalar_select %p129, %s130, %s131
      %p135 = pneg %p129
      %p136 = scmp.eq.s32.totalorder %s17, 1
      %p137 = por %p135, %p136
      %p138 = scmp.ne.s32.totalorder %s130, %s133
      %p139 = scmp.eq.s32.totalorder %s17, 0
      %p140 = por %p138, %p139
      %p141 = scmp.ne.s32.totalorder %s130, %s133
      %p142 = scmp.eq.s32.totalorder %s22, 1
      %p143 = por %p141, %p142
      %p144 = scmp.ne.s32.totalorder %s133, %s134
      %p145 = scmp.eq.s32.totalorder %s22, 0
      %p146 = por %p144, %p145
      %p147 = scmp.ne.s32.totalorder %s133, %s134
      %p148 = scmp.eq.s32.totalorder %s23, 1
      %p149 = por %p147, %p148
      %p151 = scmp.ne.s32.totalorder %s134, %s150
      %p152 = scmp.eq.s32.totalorder %s23, 0
      %p153 = por %p151, %p152
      %p154 = scmp.le.s32.totalorder 1, %s17
      %p155 = scmp.lt.s32.totalorder %s17, 3
      %p156 = pnand %p154, %p155
      %p157 = pneg %p156
      // Predicated region
      $region9: #{tpu_custom_call.1} parent=5 // pred_check
        _
      $region10: #{tpu_custom_call.1} parent=5 // pred_check_branch
        %159 = sbr.rel (%p156) target = $region12
      $region11: #{tpu_custom_call.1} parent=5 // pred_region
        %s160 = ssub.s32 %s17, 1
        // Predicated region
        $region13: #{tpu_custom_call.1} parent=11 // pred_check
          %p161 = pneg %p76
        $region14: #{tpu_custom_call.1} parent=11 // pred_check_branch
          %163 = sbr.rel (%p161) target = $region16
        $region15: #{tpu_custom_call.1} parent=11 // pred_region
          %s165 = ssub.s32 512, 512
          %166 = vsyncadd [#allocation8], %s165
          %s167 = sshll.u32 [#allocation7], 4
          %s168 = int_to_ptr.vmem [resolvable:$true] %s167
          %173 = dma.hbm_to_vmem [thread:$0]  %s1, 512, %s168, [#allocation8], 128, 128, 8
        $region16: #{tpu_custom_call.1} parent=11 // pred_fallthru
          _
        // Predicated region
        $region17: #{tpu_custom_call.1} parent=11 // pred_check
          %p174 = pneg %p97
        $region18: #{tpu_custom_call.1} parent=11 // pred_check_branch
          %176 = sbr.rel (%p174) target = $region20
        $region19: #{tpu_custom_call.1} parent=11 // pred_region
          %s178 = ssub.s32 512, 512
          %179 = vsyncadd [#allocation8], %s178
          %s180 = sshll.u32 [#allocation9], 4
          %s181 = int_to_ptr.vmem [resolvable:$true] %s180
          %186 = dma.hbm_to_vmem [thread:$0]  %s2, 512, %s181, [#allocation8], 128, 128, 8
        $region20: #{tpu_custom_call.1} parent=11 // pred_fallthru
          _
        // Predicated region
        $region21: #{tpu_custom_call.1} parent=11 // pred_check
          %p187 = pneg %p118
        $region22: #{tpu_custom_call.1} parent=11 // pred_check_branch
          %189 = sbr.rel (%p187) target = $region24
        $region23: #{tpu_custom_call.1} parent=11 // pred_region
          _
        $region24: #{tpu_custom_call.1} parent=11 // pred_fallthru
          _
      $region12: #{tpu_custom_call.1} parent=5 // pred_fallthru
        _
      %p190 = scmp.lt.s32.totalorder %s17, 2
      // Predicated region
      $region25: #{tpu_custom_call.1} parent=5 // pred_check
        %p191 = pneg %p190
      $region26: #{tpu_custom_call.1} parent=5 // pred_check_branch
        %193 = sbr.rel (%p191) target = $region28
      $region27: #{tpu_custom_call.1} parent=5 // pred_region
        // Predicated region
        $region29: #{tpu_custom_call.1} parent=27 // pred_check
          %p194 = pneg %p49
        $region30: #{tpu_custom_call.1} parent=27 // pred_check_branch
          %196 = sbr.rel (%p194) target = $region32
        $region31: #{tpu_custom_call.1} parent=27 // pred_region
          %s197 = sand.u32 %s39, 1
          %s198 = scalar_lea.sflag [#allocation5], %s197
          %s199 = sand.u32 %s39, 1
          %s200 = smul.addr %s199, 8
          %s201 = scalar_lea.vmem [#allocation4], %s200
          %s203 = ssub.s32 128, 128
          %204 = vsyncadd %s198, %s203
          %s205 = smul.addr %s24, 128
          %s206 = scalar_lea.hbm %s0, %s205
          %s208 = sshll.u32 %s201, 4
          %s209 = int_to_ptr.vmem [resolvable:$true] %s208
          %211 = dma.hbm_to_vmem [thread:$0]  %s206, 128, %s209, %s198
        $region32: #{tpu_custom_call.1} parent=27 // pred_fallthru
          _
      $region28: #{tpu_custom_call.1} parent=5 // pred_fallthru
        _
      %p212 = scmp.le.s32.totalorder 1, %s17
      %p213 = scmp.lt.s32.totalorder %s17, 3
      %p214 = pnand %p212, %p213
      %p215 = pneg %p214
      // Predicated region
      $region33: #{tpu_custom_call.1} parent=5 // pred_check
        _
      $region34: #{tpu_custom_call.1} parent=5 // pred_check_branch
        %217 = sbr.rel (%p214) target = $region36
      $region35: #{tpu_custom_call.1} parent=5 // pred_region
        %s218 = ssub.s32 %s17, 1
        %s219 = sand.u32 %s42, 1
        %s220 = scalar_lea.sflag [#allocation5], %s219
        %s221 = sand.u32 %s42, 1
        %s222 = smul.addr %s221, 8
        %s223 = scalar_lea.vmem [#allocation4], %s222
        // Predicated region
        $region37: #{tpu_custom_call.1} parent=35 // pred_check
          %p224 = pneg %p55
        $region38: #{tpu_custom_call.1} parent=35 // pred_check_branch
          %226 = sbr.rel (%p224) target = $region40
        $region39: #{tpu_custom_call.1} parent=35 // pred_region
          %227 = dma.done %s220, 128
        $region40: #{tpu_custom_call.1} parent=35 // pred_fallthru
          _
        // Predicated region
        $region41: #{tpu_custom_call.1} parent=35 // pred_check
          %p228 = pneg %p76
        $region42: #{tpu_custom_call.1} parent=35 // pred_check_branch
          %230 = sbr.rel (%p228) target = $region44
        $region43: #{tpu_custom_call.1} parent=35 // pred_region
          %231 = dma.done [#allocation8], 512
        $region44: #{tpu_custom_call.1} parent=35 // pred_fallthru
          _
        // Predicated region
        $region45: #{tpu_custom_call.1} parent=35 // pred_check
          %p232 = pneg %p97
        $region46: #{tpu_custom_call.1} parent=35 // pred_check_branch
          %234 = sbr.rel (%p232) target = $region48
        $region47: #{tpu_custom_call.1} parent=35 // pred_region
          %235 = dma.done [#allocation8], 512
        $region48: #{tpu_custom_call.1} parent=35 // pred_fallthru
          _
        %s236 = sand.u32 %s42, 1
        %s237 = scalar_lea.sflag [#allocation5], %s236
        %s238 = sand.u32 %s42, 1
        %s239 = smul.addr %s238, 8
        %s240 = scalar_lea.vmem [#allocation4], %s239
        %p241 = pneg %p55
        %p242 = pneg %p52
        %p243 = pneg %p76
        %p244 = pneg %p73
        %p245 = pneg %p97
        %p246 = pneg %p94
        %p247 = pneg %p118
        %p248 = pneg %p115
        %p249 = pneg %p146
        %p250 = pneg %p143
        %s251 = sand.u32 %s133, 1
        %s252 = scalar_lea.sflag [#allocation6], %s251
        %s253 = sand.u32 %s133, 1
        %s254 = smul.addr %s253, 8
        %s255 = scalar_lea.vmem [#allocation10], %s254
        %p256 = scmp.eq.s32.totalorder %s27, 0
        // Predicated region
        $region49: #{tpu_custom_call.1} parent=35 // pred_check
          %p257 = pneg %p256
        $region50: #{tpu_custom_call.1} parent=35 // pred_check_branch
          %259 = sbr.rel (%p257) target = $region52
        $region51: #{tpu_custom_call.1} parent=35 // pred_region
          %v260 = vld [vmem:[%s223] sm:$0xff]
          %v261 = vld [vmem:[#allocation7] sm:$0xff]
          %v262 = vld [vmem:[#allocation7 + $0x8] sm:$0xff]
          %v263 = vld [vmem:[#allocation7 + $0x10] sm:$0xff]
          %v264 = vld [vmem:[#allocation7 + $0x18] sm:$0xff]
          %vm265 = vcmask 261120
          %v267 = vsel %vm265, %v260, 0
          %269 = vmatprep.subr.mxu0 0.0
          %270 = vmatpush1.msra.mxu0 %v261
          %271 = vmatprep.subr.mxu0 0.0
          %272 = vmatpush1.msra.mxu0 %v262
          %273 = vmatprep.subr.mxu0 0.0
          %274 = vmatpush1.msra.mxu0 %v263
          %275 = vmatprep.subr.mxu0 0.0
          %276 = vmatpush1.msra.mxu0 %v264
          %277 = vmatprep.subr.mxu0 0.0
          %278 = vmatpush1.msra.mxu0 0.0
          %279 = vmatprep.subr.mxu0 0.0
          %280 = vmatpush1.msra.mxu0 0.0
          %281 = vmatprep.subr.mxu0 0.0
          %282 = vmatpush1.msra.mxu0 0.0
          %283 = vmatprep.subr.mxu0 0.0
          %284 = vmatpush1.msra.mxu0 0.0
          %285 = vmatprep.subr.mxu0 0.0
          %286 = vmatpush1.msra.mxu0 0.0
          %287 = vmatprep.subr.mxu0 0.0
          %288 = vmatpush1.msra.mxu0 0.0
          %289 = vmatprep.subr.mxu0 0.0
          %290 = vmatpush1.msra.mxu0 0.0
          %291 = vmatprep.subr.mxu0 0.0
          %292 = vmatpush1.msra.mxu0 0.0
          %293 = vmatprep.subr.mxu0 0.0
          %294 = vmatpush1.msra.mxu0 0.0
          %295 = vmatprep.subr.mxu0 0.0
          %296 = vmatpush1.msra.mxu0 0.0
          %297 = vmatprep.subr.mxu0 0.0
          %298 = vmatpush1.msra.mxu0 0.0
          %299 = vmatprep.subr.mxu0 0.0
          %300 = vmatpush1.msra.mxu0 0.0
          %301 = vmatprep.subr.mxu0 0.0
          %302 = vmatpush1.msra.mxu0 0.0
          %303 = vmatprep.subr.mxu0 0.0
          %304 = vmatpush1.msra.mxu0 0.0
          %305 = vmatprep.subr.mxu0 0.0
          %306 = vmatpush1.msra.mxu0 0.0
          %307 = vmatprep.subr.mxu0 0.0
          %308 = vmatpush1.msra.mxu0 0.0
          %309 = vmatprep.subr.mxu0 0.0
          %310 = vmatpush1.msra.mxu0 0.0
          %311 = vmatprep.subr.mxu0 0.0
          %312 = vmatpush1.msra.mxu0 0.0
          %313 = vmatprep.subr.mxu0 0.0
          %314 = vmatpush1.msra.mxu0 0.0
          %315 = vmatprep.subr.mxu0 0.0
          %316 = vmatpush1.msra.mxu0 0.0
          %317 = vmatprep.subr.mxu0 0.0
          %318 = vmatpush1.msra.mxu0 0.0
          %319 = vmatprep.subr.mxu0 0.0
          %320 = vmatpush1.msra.mxu0 0.0
          %321 = vmatprep.subr.mxu0 0.0
          %322 = vmatpush1.msra.mxu0 0.0
          %323 = vmatprep.subr.mxu0 0.0
          %324 = vmatpush1.msra.mxu0 0.0
          %325 = vmatprep.subr.mxu0 0.0
          %326 = vmatpush1.msra.mxu0 0.0
          %327 = vmatprep.subr.mxu0 0.0
          %328 = vmatpush1.msra.mxu0 0.0
          %329 = vmatprep.subr.mxu0 0.0
          %330 = vmatpush1.msra.mxu0 0.0
          %331 = vmatprep.subr.mxu0 0.0
          %332 = vmatpush1.msra.mxu0 0.0
          %333 = vmatprep.mubr.f32.mxu0 0.0
          %334 = vmatmul.mubr.f32.gmra.mrb[0].mxu0 %v267
          %v335 = vpop.f32.mrb[0].mxu0
          %v336 = vadd.f32 0.0, %v335
          %v337 = vpop.f32.mrb[0].mxu0
          %338 = vdwg.mxu0
          %vm339 = vcmask 785408
          %340 = vst.msk [vmem:[#allocation2] sm:$0xff] %vm339, %v336
        $region52: #{tpu_custom_call.1} parent=35 // pred_fallthru
          _
        %s341 = smul.u32 %s27, 8
        %s342 = scalar_lea.vmem [#allocation2], %s341
        %v343 = vld [vmem:[%s342] sm:$0xff]
        %v344 = vld [vmem:[#allocation2] sm:$0xff]
        %346 = vrot.lane.b32.xlu0 %v344, 96
        %v347 = vpop.permute.xlu0 %346
        %vm348 = vcmask 64512
        %v350 = vsel %vm348, %v343, 0
        %v352 = vsel %vm348, %v347, 0
        %354 = vmatprep.subr.mxu0 0.0
        %355 = vmatpush1.xpose.msra.mxu0 %v352
        %356 = vmatprep.subr.mxu0 0.0
        %357 = vmatpush1.xpose.msra.mxu0 0.0
        %358 = vmatprep.subr.mxu0 0.0
        %359 = vmatpush1.xpose.msra.mxu0 0.0
        %360 = vmatprep.subr.mxu0 0.0
        %361 = vmatpush1.xpose.msra.mxu0 0.0
        %362 = vmatprep.subr.mxu0 0.0
        %363 = vmatpush1.xpose.msra.mxu0 0.0
        %364 = vmatprep.subr.mxu0 0.0
        %365 = vmatpush1.xpose.msra.mxu0 0.0
        %366 = vmatprep.subr.mxu0 0.0
        %367 = vmatpush1.xpose.msra.mxu0 0.0
        %368 = vmatprep.subr.mxu0 0.0
        %369 = vmatpush1.xpose.msra.mxu0 0.0
        %370 = vmatprep.subr.mxu0 0.0
        %371 = vmatpush1.xpose.msra.mxu0 0.0
        %372 = vmatprep.subr.mxu0 0.0
        %373 = vmatpush1.xpose.msra.mxu0 0.0
        %374 = vmatprep.subr.mxu0 0.0
        %375 = vmatpush1.xpose.msra.mxu0 0.0
        %376 = vmatprep.subr.mxu0 0.0
        %377 = vmatpush1.xpose.msra.mxu0 0.0
        %378 = vmatprep.subr.mxu0 0.0
        %379 = vmatpush1.xpose.msra.mxu0 0.0
        %380 = vmatprep.subr.mxu0 0.0
        %381 = vmatpush1.xpose.msra.mxu0 0.0
        %382 = vmatprep.subr.mxu0 0.0
        %383 = vmatpush1.xpose.msra.mxu0 0.0
        %384 = vmatprep.subr.mxu0 0.0
        %385 = vmatpush1.xpose.msra.mxu0 0.0
        %386 = vmatprep.subr.mxu0 0.0
        %387 = vmatpush1.xpose.msra.mxu0 0.0
        %388 = vmatprep.subr.mxu0 0.0
        %389 = vmatpush1.xpose.msra.mxu0 0.0
        %390 = vmatprep.subr.mxu0 0.0
        %391 = vmatpush1.xpose.msra.mxu0 0.0
        %392 = vmatprep.subr.mxu0 0.0
        %393 = vmatpush1.xpose.msra.mxu0 0.0
        %394 = vmatprep.subr.mxu0 0.0
        %395 = vmatpush1.xpose.msra.mxu0 0.0
        %396 = vmatprep.subr.mxu0 0.0
        %397 = vmatpush1.xpose.msra.mxu0 0.0
        %398 = vmatprep.subr.mxu0 0.0
        %399 = vmatpush1.xpose.msra.mxu0 0.0
        %400 = vmatprep.subr.mxu0 0.0
        %401 = vmatpush1.xpose.msra.mxu0 0.0
        %402 = vmatprep.subr.mxu0 0.0
        %403 = vmatpush1.xpose.msra.mxu0 0.0
        %404 = vmatprep.subr.mxu0 0.0
        %405 = vmatpush1.xpose.msra.mxu0 0.0
        %406 = vmatprep.subr.mxu0 0.0
        %407 = vmatpush1.xpose.msra.mxu0 0.0
        %408 = vmatprep.subr.mxu0 0.0
        %409 = vmatpush1.xpose.msra.mxu0 0.0
        %410 = vmatprep.subr.mxu0 0.0
        %411 = vmatpush1.xpose.msra.mxu0 0.0
        %412 = vmatprep.subr.mxu0 0.0
        %413 = vmatpush1.xpose.msra.mxu0 0.0
        %414 = vmatprep.subr.mxu0 0.0
        %415 = vmatpush1.xpose.msra.mxu0 0.0
        %416 = vmatprep.subr.mxu0 0.0
        %417 = vmatpush1.xpose.msra.mxu0 0.0
        %418 = vmatprep.mubr.f32.mxu0 0.0
        %419 = vmatmul.mubr.f32.gmra.mrb[0].mxu0 %v350
        %v420 = vpop.f32.mrb[0].mxu0
        %v421 = vadd.f32 0.0, %v420
        %v422 = vpop.f32.mrb[0].mxu0
        %423 = vdwg.mxu0
        %v424 = vsel %vm348, %v421, -inf
        %425 = vmax.xlane.f32.xlu0 %v424
        %v426 = vpop.xlane.xlu0 %425
        %v427 = vsub.f32 %v421, %v426
        %v428 = vmul.f32 %v427, 1.442695
        %v429 = vpow.pop %v428
        %v430 = vsel %vm348, %v429, 0.0
        %431 = vadd.xlane.f32.xlu0 %v430
        %v432 = vpop.xlane.xlu0 %431
        %433 = vrot.lane.b32.xlu0 %v344, 64
        %v434 = vpop.permute.xlu0 %433
        %v437 = vsel %vm348, %v429, 0
        %439 = vmatprep.subr.mxu0 0.0
        %440 = vmatpush1.msra.mxu0 %v434
        %441 = vmatprep.subr.mxu0 0.0
        %442 = vmatpush1.msra.mxu0 0.0
        %443 = vmatprep.subr.mxu0 0.0
        %444 = vmatpush1.msra.mxu0 0.0
        %445 = vmatprep.subr.mxu0 0.0
        %446 = vmatpush1.msra.mxu0 0.0
        %447 = vmatprep.subr.mxu0 0.0
        %448 = vmatpush1.msra.mxu0 0.0
        %449 = vmatprep.subr.mxu0 0.0
        %450 = vmatpush1.msra.mxu0 0.0
        %451 = vmatprep.subr.mxu0 0.0
        %452 = vmatpush1.msra.mxu0 0.0
        %453 = vmatprep.subr.mxu0 0.0
        %454 = vmatpush1.msra.mxu0 0.0
        %455 = vmatprep.subr.mxu0 0.0
        %456 = vmatpush1.msra.mxu0 0.0
        %457 = vmatprep.subr.mxu0 0.0
        %458 = vmatpush1.msra.mxu0 0.0
        %459 = vmatprep.subr.mxu0 0.0
        %460 = vmatpush1.msra.mxu0 0.0
        %461 = vmatprep.subr.mxu0 0.0
        %462 = vmatpush1.msra.mxu0 0.0
        %463 = vmatprep.subr.mxu0 0.0
        %464 = vmatpush1.msra.mxu0 0.0
        %465 = vmatprep.subr.mxu0 0.0
        %466 = vmatpush1.msra.mxu0 0.0
        %467 = vmatprep.subr.mxu0 0.0
        %468 = vmatpush1.msra.mxu0 0.0
        %469 = vmatprep.subr.mxu0 0.0
        %470 = vmatpush1.msra.mxu0 0.0
        %471 = vmatprep.subr.mxu0 0.0
        %472 = vmatpush1.msra.mxu0 0.0
        %473 = vmatprep.subr.mxu0 0.0
        %474 = vmatpush1.msra.mxu0 0.0
        %475 = vmatprep.subr.mxu0 0.0
        %476 = vmatpush1.msra.mxu0 0.0
        %477 = vmatprep.subr.mxu0 0.0
        %478 = vmatpush1.msra.mxu0 0.0
        %479 = vmatprep.subr.mxu0 0.0
        %480 = vmatpush1.msra.mxu0 0.0
        %481 = vmatprep.subr.mxu0 0.0
        %482 = vmatpush1.msra.mxu0 0.0
        %483 = vmatprep.subr.mxu0 0.0
        %484 = vmatpush1.msra.mxu0 0.0
        %485 = vmatprep.subr.mxu0 0.0
        %486 = vmatpush1.msra.mxu0 0.0
        %487 = vmatprep.subr.mxu0 0.0
        %488 = vmatpush1.msra.mxu0 0.0
        %489 = vmatprep.subr.mxu0 0.0
        %490 = vmatpush1.msra.mxu0 0.0
        %491 = vmatprep.subr.mxu0 0.0
        %492 = vmatpush1.msra.mxu0 0.0
        %493 = vmatprep.subr.mxu0 0.0
        %494 = vmatpush1.msra.mxu0 0.0
        %495 = vmatprep.subr.mxu0 0.0
        %496 = vmatpush1.msra.mxu0 0.0
        %497 = vmatprep.subr.mxu0 0.0
        %498 = vmatpush1.msra.mxu0 0.0
        %499 = vmatprep.subr.mxu0 0.0
        %500 = vmatpush1.msra.mxu0 0.0
        %501 = vmatprep.subr.mxu0 0.0
        %502 = vmatpush1.msra.mxu0 0.0
        %503 = vmatprep.mubr.f32.mxu0 0.0
        %504 = vmatmul.mubr.f32.gmra.mrb[0].mxu0 %v437
        %v505 = vpop.f32.mrb[0].mxu0
        %v506 = vadd.f32 0.0, %v505
        %v507 = vpop.f32.mrb[0].mxu0
        %508 = vdwg.mxu0
        %v509 = vrcp.pop %v432
        %v510 = vmul.f32 %v506, %v509
        %511 = vst.msk [vmem:[#allocation3] sm:$0xff] %vm348, %v510
        %v512 = vld [vmem:[%s342] sm:$0xff]
        %v513 = vld [vmem:[#allocation2] sm:$0xff]
        %515 = vrot.lane.b32.xlu0 %v512, 120
        %v516 = vpop.permute.xlu0 %515
        %518 = vrot.lane.b32.xlu0 %v513, 88
        %v519 = vpop.permute.xlu0 %518
        %v520 = vsel %vm348, %v516, 0
        %v522 = vsel %vm348, %v519, 0
        %524 = vmatprep.subr.mxu0 0.0
        %525 = vmatpush1.xpose.msra.mxu0 %v522
        %526 = vmatprep.subr.mxu0 0.0
        %527 = vmatpush1.xpose.msra.mxu0 0.0
        %528 = vmatprep.subr.mxu0 0.0
        %529 = vmatpush1.xpose.msra.mxu0 0.0
        %530 = vmatprep.subr.mxu0 0.0
        %531 = vmatpush1.xpose.msra.mxu0 0.0
        %532 = vmatprep.subr.mxu0 0.0
        %533 = vmatpush1.xpose.msra.mxu0 0.0
        %534 = vmatprep.subr.mxu0 0.0
        %535 = vmatpush1.xpose.msra.mxu0 0.0
        %536 = vmatprep.subr.mxu0 0.0
        %537 = vmatpush1.xpose.msra.mxu0 0.0
        %538 = vmatprep.subr.mxu0 0.0
        %539 = vmatpush1.xpose.msra.mxu0 0.0
        %540 = vmatprep.subr.mxu0 0.0
        %541 = vmatpush1.xpose.msra.mxu0 0.0
        %542 = vmatprep.subr.mxu0 0.0
        %543 = vmatpush1.xpose.msra.mxu0 0.0
        %544 = vmatprep.subr.mxu0 0.0
        %545 = vmatpush1.xpose.msra.mxu0 0.0
        %546 = vmatprep.subr.mxu0 0.0
        %547 = vmatpush1.xpose.msra.mxu0 0.0
        %548 = vmatprep.subr.mxu0 0.0
        %549 = vmatpush1.xpose.msra.mxu0 0.0
        %550 = vmatprep.subr.mxu0 0.0
        %551 = vmatpush1.xpose.msra.mxu0 0.0
        %552 = vmatprep.subr.mxu0 0.0
        %553 = vmatpush1.xpose.msra.mxu0 0.0
        %554 = vmatprep.subr.mxu0 0.0
        %555 = vmatpush1.xpose.msra.mxu0 0.0
        %556 = vmatprep.subr.mxu0 0.0
        %557 = vmatpush1.xpose.msra.mxu0 0.0
        %558 = vmatprep.subr.mxu0 0.0
        %559 = vmatpush1.xpose.msra.mxu0 0.0
        %560 = vmatprep.subr.mxu0 0.0
        %561 = vmatpush1.xpose.msra.mxu0 0.0
        %562 = vmatprep.subr.mxu0 0.0
        %563 = vmatpush1.xpose.msra.mxu0 0.0
        %564 = vmatprep.subr.mxu0 0.0
        %565 = vmatpush1.xpose.msra.mxu0 0.0
        %566 = vmatprep.subr.mxu0 0.0
        %567 = vmatpush1.xpose.msra.mxu0 0.0
        %568 = vmatprep.subr.mxu0 0.0
        %569 = vmatpush1.xpose.msra.mxu0 0.0
        %570 = vmatprep.subr.mxu0 0.0
        %571 = vmatpush1.xpose.msra.mxu0 0.0
        %572 = vmatprep.subr.mxu0 0.0
        %573 = vmatpush1.xpose.msra.mxu0 0.0
        %574 = vmatprep.subr.mxu0 0.0
        %575 = vmatpush1.xpose.msra.mxu0 0.0
        %576 = vmatprep.subr.mxu0 0.0
        %577 = vmatpush1.xpose.msra.mxu0 0.0
        %578 = vmatprep.subr.mxu0 0.0
        %579 = vmatpush1.xpose.msra.mxu0 0.0
        %580 = vmatprep.subr.mxu0 0.0
        %581 = vmatpush1.xpose.msra.mxu0 0.0
        %582 = vmatprep.subr.mxu0 0.0
        %583 = vmatpush1.xpose.msra.mxu0 0.0
        %584 = vmatprep.subr.mxu0 0.0
        %585 = vmatpush1.xpose.msra.mxu0 0.0
        %586 = vmatprep.subr.mxu0 0.0
        %587 = vmatpush1.xpose.msra.mxu0 0.0
        %588 = vmatprep.mubr.f32.mxu0 0.0
        %589 = vmatmul.mubr.f32.gmra.mrb[0].mxu0 %v520
        %v590 = vpop.f32.mrb[0].mxu0
        %v591 = vadd.f32 0.0, %v590
        %v592 = vpop.f32.mrb[0].mxu0
        %593 = vdwg.mxu0
        %v594 = vsel %vm348, %v591, -inf
        %595 = vmax.xlane.f32.xlu0 %v594
        %v596 = vpop.xlane.xlu0 %595
        %v597 = vsub.f32 %v591, %v596
        %v598 = vmul.f32 %v597, 1.442695
        %v599 = vpow.pop %v598
        %v600 = vsel %vm348, %v599, 0.0
        %601 = vadd.xlane.f32.xlu0 %v600
        %v602 = vpop.xlane.xlu0 %601
        %603 = vrot.lane.b32.xlu0 %v513, 56
        %v604 = vpop.permute.xlu0 %603
        %v607 = vsel %vm348, %v599, 0
        %609 = vmatprep.subr.mxu0 0.0
        %610 = vmatpush1.msra.mxu0 %v604
        %611 = vmatprep.subr.mxu0 0.0
        %612 = vmatpush1.msra.mxu0 0.0
        %613 = vmatprep.subr.mxu0 0.0
        %614 = vmatpush1.msra.mxu0 0.0
        %615 = vmatprep.subr.mxu0 0.0
        %616 = vmatpush1.msra.mxu0 0.0
        %617 = vmatprep.subr.mxu0 0.0
        %618 = vmatpush1.msra.mxu0 0.0
        %619 = vmatprep.subr.mxu0 0.0
        %620 = vmatpush1.msra.mxu0 0.0
        %621 = vmatprep.subr.mxu0 0.0
        %622 = vmatpush1.msra.mxu0 0.0
        %623 = vmatprep.subr.mxu0 0.0
        %624 = vmatpush1.msra.mxu0 0.0
        %625 = vmatprep.subr.mxu0 0.0
        %626 = vmatpush1.msra.mxu0 0.0
        %627 = vmatprep.subr.mxu0 0.0
        %628 = vmatpush1.msra.mxu0 0.0
        %629 = vmatprep.subr.mxu0 0.0
        %630 = vmatpush1.msra.mxu0 0.0
        %631 = vmatprep.subr.mxu0 0.0
        %632 = vmatpush1.msra.mxu0 0.0
        %633 = vmatprep.subr.mxu0 0.0
        %634 = vmatpush1.msra.mxu0 0.0
        %635 = vmatprep.subr.mxu0 0.0
        %636 = vmatpush1.msra.mxu0 0.0
        %637 = vmatprep.subr.mxu0 0.0
        %638 = vmatpush1.msra.mxu0 0.0
        %639 = vmatprep.subr.mxu0 0.0
        %640 = vmatpush1.msra.mxu0 0.0
        %641 = vmatprep.subr.mxu0 0.0
        %642 = vmatpush1.msra.mxu0 0.0
        %643 = vmatprep.subr.mxu0 0.0
        %644 = vmatpush1.msra.mxu0 0.0
        %645 = vmatprep.subr.mxu0 0.0
        %646 = vmatpush1.msra.mxu0 0.0
        %647 = vmatprep.subr.mxu0 0.0
        %648 = vmatpush1.msra.mxu0 0.0
        %649 = vmatprep.subr.mxu0 0.0
        %650 = vmatpush1.msra.mxu0 0.0
        %651 = vmatprep.subr.mxu0 0.0
        %652 = vmatpush1.msra.mxu0 0.0
        %653 = vmatprep.subr.mxu0 0.0
        %654 = vmatpush1.msra.mxu0 0.0
        %655 = vmatprep.subr.mxu0 0.0
        %656 = vmatpush1.msra.mxu0 0.0
        %657 = vmatprep.subr.mxu0 0.0
        %658 = vmatpush1.msra.mxu0 0.0
        %659 = vmatprep.subr.mxu0 0.0
        %660 = vmatpush1.msra.mxu0 0.0
        %661 = vmatprep.subr.mxu0 0.0
        %662 = vmatpush1.msra.mxu0 0.0
        %663 = vmatprep.subr.mxu0 0.0
        %664 = vmatpush1.msra.mxu0 0.0
        %665 = vmatprep.subr.mxu0 0.0
        %666 = vmatpush1.msra.mxu0 0.0
        %667 = vmatprep.subr.mxu0 0.0
        %668 = vmatpush1.msra.mxu0 0.0
        %669 = vmatprep.subr.mxu0 0.0
        %670 = vmatpush1.msra.mxu0 0.0
        %671 = vmatprep.subr.mxu0 0.0
        %672 = vmatpush1.msra.mxu0 0.0
        %673 = vmatprep.mubr.f32.mxu0 0.0
        %674 = vmatmul.mubr.f32.gmra.mrb[0].mxu0 %v607
        %v675 = vpop.f32.mrb[0].mxu0
        %v676 = vadd.f32 0.0, %v675
        %v677 = vpop.f32.mrb[0].mxu0
        %678 = vdwg.mxu0
        %v679 = vrcp.pop %v602
        %v680 = vmul.f32 %v676, %v679
        %682 = vrot.lane.b32.xlu0 %v680, 8
        %v683 = vpop.permute.xlu0 %682
        %vm685 = vcmask 130112
        %686 = vst.msk [vmem:[#allocation3] sm:$0xff] %vm685, %v683
        %v687 = vld [vmem:[%s342] sm:$0xff]
        %v688 = vld [vmem:[#allocation2] sm:$0xff]
        %690 = vrot.lane.b32.xlu0 %v687, 112
        %v691 = vpop.permute.xlu0 %690
        %693 = vrot.lane.b32.xlu0 %v688, 80
        %v694 = vpop.permute.xlu0 %693
        %v695 = vsel %vm348, %v691, 0
        %v697 = vsel %vm348, %v694, 0
        %699 = vmatprep.subr.mxu0 0.0
        %700 = vmatpush1.xpose.msra.mxu0 %v697
        %701 = vmatprep.subr.mxu0 0.0
        %702 = vmatpush1.xpose.msra.mxu0 0.0
        %703 = vmatprep.subr.mxu0 0.0
        %704 = vmatpush1.xpose.msra.mxu0 0.0
        %705 = vmatprep.subr.mxu0 0.0
        %706 = vmatpush1.xpose.msra.mxu0 0.0
        %707 = vmatprep.subr.mxu0 0.0
        %708 = vmatpush1.xpose.msra.mxu0 0.0
        %709 = vmatprep.subr.mxu0 0.0
        %710 = vmatpush1.xpose.msra.mxu0 0.0
        %711 = vmatprep.subr.mxu0 0.0
        %712 = vmatpush1.xpose.msra.mxu0 0.0
        %713 = vmatprep.subr.mxu0 0.0
        %714 = vmatpush1.xpose.msra.mxu0 0.0
        %715 = vmatprep.subr.mxu0 0.0
        %716 = vmatpush1.xpose.msra.mxu0 0.0
        %717 = vmatprep.subr.mxu0 0.0
        %718 = vmatpush1.xpose.msra.mxu0 0.0
        %719 = vmatprep.subr.mxu0 0.0
        %720 = vmatpush1.xpose.msra.mxu0 0.0
        %721 = vmatprep.subr.mxu0 0.0
        %722 = vmatpush1.xpose.msra.mxu0 0.0
        %723 = vmatprep.subr.mxu0 0.0
        %724 = vmatpush1.xpose.msra.mxu0 0.0
        %725 = vmatprep.subr.mxu0 0.0
        %726 = vmatpush1.xpose.msra.mxu0 0.0
        %727 = vmatprep.subr.mxu0 0.0
        %728 = vmatpush1.xpose.msra.mxu0 0.0
        %729 = vmatprep.subr.mxu0 0.0
        %730 = vmatpush1.xpose.msra.mxu0 0.0
        %731 = vmatprep.subr.mxu0 0.0
        %732 = vmatpush1.xpose.msra.mxu0 0.0
        %733 = vmatprep.subr.mxu0 0.0
        %734 = vmatpush1.xpose.msra.mxu0 0.0
        %735 = vmatprep.subr.mxu0 0.0
        %736 = vmatpush1.xpose.msra.mxu0 0.0
        %737 = vmatprep.subr.mxu0 0.0
        %738 = vmatpush1.xpose.msra.mxu0 0.0
        %739 = vmatprep.subr.mxu0 0.0
        %740 = vmatpush1.xpose.msra.mxu0 0.0
        %741 = vmatprep.subr.mxu0 0.0
        %742 = vmatpush1.xpose.msra.mxu0 0.0
        %743 = vmatprep.subr.mxu0 0.0
        %744 = vmatpush1.xpose.msra.mxu0 0.0
        %745 = vmatprep.subr.mxu0 0.0
        %746 = vmatpush1.xpose.msra.mxu0 0.0
        %747 = vmatprep.subr.mxu0 0.0
        %748 = vmatpush1.xpose.msra.mxu0 0.0
        %749 = vmatprep.subr.mxu0 0.0
        %750 = vmatpush1.xpose.msra.mxu0 0.0
        %751 = vmatprep.subr.mxu0 0.0
        %752 = vmatpush1.xpose.msra.mxu0 0.0
        %753 = vmatprep.subr.mxu0 0.0
        %754 = vmatpush1.xpose.msra.mxu0 0.0
        %755 = vmatprep.subr.mxu0 0.0
        %756 = vmatpush1.xpose.msra.mxu0 0.0
        %757 = vmatprep.subr.mxu0 0.0
        %758 = vmatpush1.xpose.msra.mxu0 0.0
        %759 = vmatprep.subr.mxu0 0.0
        %760 = vmatpush1.xpose.msra.mxu0 0.0
        %761 = vmatprep.subr.mxu0 0.0
        %762 = vmatpush1.xpose.msra.mxu0 0.0
        %763 = vmatprep.mubr.f32.mxu0 0.0
        %764 = vmatmul.mubr.f32.gmra.mrb[0].mxu0 %v695
        %v765 = vpop.f32.mrb[0].mxu0
        %v766 = vadd.f32 0.0, %v765
        %v767 = vpop.f32.mrb[0].mxu0
        %768 = vdwg.mxu0
        %v769 = vsel %vm348, %v766, -inf
        %770 = vmax.xlane.f32.xlu0 %v769
        %v771 = vpop.xlane.xlu0 %770
        %v772 = vsub.f32 %v766, %v771
        %v773 = vmul.f32 %v772, 1.442695
        %v774 = vpow.pop %v773
        %v775 = vsel %vm348, %v774, 0.0
        %776 = vadd.xlane.f32.xlu0 %v775
        %v777 = vpop.xlane.xlu0 %776
        %778 = vrot.lane.b32.xlu0 %v688, 48
        %v779 = vpop.permute.xlu0 %778
        %v782 = vsel %vm348, %v774, 0
        %784 = vmatprep.subr.mxu0 0.0
        %785 = vmatpush1.msra.mxu0 %v779
        %786 = vmatprep.subr.mxu0 0.0
        %787 = vmatpush1.msra.mxu0 0.0
        %788 = vmatprep.subr.mxu0 0.0
        %789 = vmatpush1.msra.mxu0 0.0
        %790 = vmatprep.subr.mxu0 0.0
        %791 = vmatpush1.msra.mxu0 0.0
        %792 = vmatprep.subr.mxu0 0.0
        %793 = vmatpush1.msra.mxu0 0.0
        %794 = vmatprep.subr.mxu0 0.0
        %795 = vmatpush1.msra.mxu0 0.0
        %796 = vmatprep.subr.mxu0 0.0
        %797 = vmatpush1.msra.mxu0 0.0
        %798 = vmatprep.subr.mxu0 0.0
        %799 = vmatpush1.msra.mxu0 0.0
        %800 = vmatprep.subr.mxu0 0.0
        %801 = vmatpush1.msra.mxu0 0.0
        %802 = vmatprep.subr.mxu0 0.0
        %803 = vmatpush1.msra.mxu0 0.0
        %804 = vmatprep.subr.mxu0 0.0
        %805 = vmatpush1.msra.mxu0 0.0
        %806 = vmatprep.subr.mxu0 0.0
        %807 = vmatpush1.msra.mxu0 0.0
        %808 = vmatprep.subr.mxu0 0.0
        %809 = vmatpush1.msra.mxu0 0.0
        %810 = vmatprep.subr.mxu0 0.0
        %811 = vmatpush1.msra.mxu0 0.0
        %812 = vmatprep.subr.mxu0 0.0
        %813 = vmatpush1.msra.mxu0 0.0
        %814 = vmatprep.subr.mxu0 0.0
        %815 = vmatpush1.msra.mxu0 0.0
        %816 = vmatprep.subr.mxu0 0.0
        %817 = vmatpush1.msra.mxu0 0.0
        %818 = vmatprep.subr.mxu0 0.0
        %819 = vmatpush1.msra.mxu0 0.0
        %820 = vmatprep.subr.mxu0 0.0
        %821 = vmatpush1.msra.mxu0 0.0
        %822 = vmatprep.subr.mxu0 0.0
        %823 = vmatpush1.msra.mxu0 0.0
        %824 = vmatprep.subr.mxu0 0.0
        %825 = vmatpush1.msra.mxu0 0.0
        %826 = vmatprep.subr.mxu0 0.0
        %827 = vmatpush1.msra.mxu0 0.0
        %828 = vmatprep.subr.mxu0 0.0
        %829 = vmatpush1.msra.mxu0 0.0
        %830 = vmatprep.subr.mxu0 0.0
        %831 = vmatpush1.msra.mxu0 0.0
        %832 = vmatprep.subr.mxu0 0.0
        %833 = vmatpush1.msra.mxu0 0.0
        %834 = vmatprep.subr.mxu0 0.0
        %835 = vmatpush1.msra.mxu0 0.0
        %836 = vmatprep.subr.mxu0 0.0
        %837 = vmatpush1.msra.mxu0 0.0
        %838 = vmatprep.subr.mxu0 0.0
        %839 = vmatpush1.msra.mxu0 0.0
        %840 = vmatprep.subr.mxu0 0.0
        %841 = vmatpush1.msra.mxu0 0.0
        %842 = vmatprep.subr.mxu0 0.0
        %843 = vmatpush1.msra.mxu0 0.0
        %844 = vmatprep.subr.mxu0 0.0
        %845 = vmatpush1.msra.mxu0 0.0
        %846 = vmatprep.subr.mxu0 0.0
        %847 = vmatpush1.msra.mxu0 0.0
        %848 = vmatprep.mubr.f32.mxu0 0.0
        %849 = vmatmul.mubr.f32.gmra.mrb[0].mxu0 %v782
        %v850 = vpop.f32.mrb[0].mxu0
        %v851 = vadd.f32 0.0, %v850
        %v852 = vpop.f32.mrb[0].mxu0
        %853 = vdwg.mxu0
        %v854 = vrcp.pop %v777
        %v855 = vmul.f32 %v851, %v854
        %857 = vrot.lane.b32.xlu0 %v855, 16
        %v858 = vpop.permute.xlu0 %857
        %vm860 = vcmask 195712
        %861 = vst.msk [vmem:[#allocation3] sm:$0xff] %vm860, %v858
        %v862 = vld [vmem:[%s342] sm:$0xff]
        %v863 = vld [vmem:[#allocation2] sm:$0xff]
        %865 = vrot.lane.b32.xlu0 %v862, 104
        %v866 = vpop.permute.xlu0 %865
        %868 = vrot.lane.b32.xlu0 %v863, 72
        %v869 = vpop.permute.xlu0 %868
        %v870 = vsel %vm348, %v866, 0
        %v872 = vsel %vm348, %v869, 0
        %874 = vmatprep.subr.mxu0 0.0
        %875 = vmatpush1.xpose.msra.mxu0 %v872
        %876 = vmatprep.subr.mxu0 0.0
        %877 = vmatpush1.xpose.msra.mxu0 0.0
        %878 = vmatprep.subr.mxu0 0.0
        %879 = vmatpush1.xpose.msra.mxu0 0.0
        %880 = vmatprep.subr.mxu0 0.0
        %881 = vmatpush1.xpose.msra.mxu0 0.0
        %882 = vmatprep.subr.mxu0 0.0
        %883 = vmatpush1.xpose.msra.mxu0 0.0
        %884 = vmatprep.subr.mxu0 0.0
        %885 = vmatpush1.xpose.msra.mxu0 0.0
        %886 = vmatprep.subr.mxu0 0.0
        %887 = vmatpush1.xpose.msra.mxu0 0.0
        %888 = vmatprep.subr.mxu0 0.0
        %889 = vmatpush1.xpose.msra.mxu0 0.0
        %890 = vmatprep.subr.mxu0 0.0
        %891 = vmatpush1.xpose.msra.mxu0 0.0
        %892 = vmatprep.subr.mxu0 0.0
        %893 = vmatpush1.xpose.msra.mxu0 0.0
        %894 = vmatprep.subr.mxu0 0.0
        %895 = vmatpush1.xpose.msra.mxu0 0.0
        %896 = vmatprep.subr.mxu0 0.0
        %897 = vmatpush1.xpose.msra.mxu0 0.0
        %898 = vmatprep.subr.mxu0 0.0
        %899 = vmatpush1.xpose.msra.mxu0 0.0
        %900 = vmatprep.subr.mxu0 0.0
        %901 = vmatpush1.xpose.msra.mxu0 0.0
        %902 = vmatprep.subr.mxu0 0.0
        %903 = vmatpush1.xpose.msra.mxu0 0.0
        %904 = vmatprep.subr.mxu0 0.0
        %905 = vmatpush1.xpose.msra.mxu0 0.0
        %906 = vmatprep.subr.mxu0 0.0
        %907 = vmatpush1.xpose.msra.mxu0 0.0
        %908 = vmatprep.subr.mxu0 0.0
        %909 = vmatpush1.xpose.msra.mxu0 0.0
        %910 = vmatprep.subr.mxu0 0.0
        %911 = vmatpush1.xpose.msra.mxu0 0.0
        %912 = vmatprep.subr.mxu0 0.0
        %913 = vmatpush1.xpose.msra.mxu0 0.0
        %914 = vmatprep.subr.mxu0 0.0
        %915 = vmatpush1.xpose.msra.mxu0 0.0
        %916 = vmatprep.subr.mxu0 0.0
        %917 = vmatpush1.xpose.msra.mxu0 0.0
        %918 = vmatprep.subr.mxu0 0.0
        %919 = vmatpush1.xpose.msra.mxu0 0.0
        %920 = vmatprep.subr.mxu0 0.0
        %921 = vmatpush1.xpose.msra.mxu0 0.0
        %922 = vmatprep.subr.mxu0 0.0
        %923 = vmatpush1.xpose.msra.mxu0 0.0
        %924 = vmatprep.subr.mxu0 0.0
        %925 = vmatpush1.xpose.msra.mxu0 0.0
        %926 = vmatprep.subr.mxu0 0.0
        %927 = vmatpush1.xpose.msra.mxu0 0.0
        %928 = vmatprep.subr.mxu0 0.0
        %929 = vmatpush1.xpose.msra.mxu0 0.0
        %930 = vmatprep.subr.mxu0 0.0
        %931 = vmatpush1.xpose.msra.mxu0 0.0
        %932 = vmatprep.subr.mxu0 0.0
        %933 = vmatpush1.xpose.msra.mxu0 0.0
        %934 = vmatprep.subr.mxu0 0.0
        %935 = vmatpush1.xpose.msra.mxu0 0.0
        %936 = vmatprep.subr.mxu0 0.0
        %937 = vmatpush1.xpose.msra.mxu0 0.0
        %938 = vmatprep.mubr.f32.mxu0 0.0
        %939 = vmatmul.mubr.f32.gmra.mrb[0].mxu0 %v870
        %v940 = vpop.f32.mrb[0].mxu0
        %v941 = vadd.f32 0.0, %v940
        %v942 = vpop.f32.mrb[0].mxu0
        %943 = vdwg.mxu0
        %v944 = vsel %vm348, %v941, -inf
        %945 = vmax.xlane.f32.xlu0 %v944
        %v946 = vpop.xlane.xlu0 %945
        %v947 = vsub.f32 %v941, %v946
        %v948 = vmul.f32 %v947, 1.442695
        %v949 = vpow.pop %v948
        %v950 = vsel %vm348, %v949, 0.0
        %951 = vadd.xlane.f32.xlu0 %v950
        %v952 = vpop.xlane.xlu0 %951
        %953 = vrot.lane.b32.xlu0 %v863, 40
        %v954 = vpop.permute.xlu0 %953
        %v957 = vsel %vm348, %v949, 0
        %959 = vmatprep.subr.mxu0 0.0
        %960 = vmatpush1.msra.mxu0 %v954
        %961 = vmatprep.subr.mxu0 0.0
        %962 = vmatpush1.msra.mxu0 0.0
        %963 = vmatprep.subr.mxu0 0.0
        %964 = vmatpush1.msra.mxu0 0.0
        %965 = vmatprep.subr.mxu0 0.0
        %966 = vmatpush1.msra.mxu0 0.0
        %967 = vmatprep.subr.mxu0 0.0
        %968 = vmatpush1.msra.mxu0 0.0
        %969 = vmatprep.subr.mxu0 0.0
        %970 = vmatpush1.msra.mxu0 0.0
        %971 = vmatprep.subr.mxu0 0.0
        %972 = vmatpush1.msra.mxu0 0.0
        %973 = vmatprep.subr.mxu0 0.0
        %974 = vmatpush1.msra.mxu0 0.0
        %975 = vmatprep.subr.mxu0 0.0
        %976 = vmatpush1.msra.mxu0 0.0
        %977 = vmatprep.subr.mxu0 0.0
        %978 = vmatpush1.msra.mxu0 0.0
        %979 = vmatprep.subr.mxu0 0.0
        %980 = vmatpush1.msra.mxu0 0.0
        %981 = vmatprep.subr.mxu0 0.0
        %982 = vmatpush1.msra.mxu0 0.0
        %983 = vmatprep.subr.mxu0 0.0
        %984 = vmatpush1.msra.mxu0 0.0
        %985 = vmatprep.subr.mxu0 0.0
        %986 = vmatpush1.msra.mxu0 0.0
        %987 = vmatprep.subr.mxu0 0.0
        %988 = vmatpush1.msra.mxu0 0.0
        %989 = vmatprep.subr.mxu0 0.0
        %990 = vmatpush1.msra.mxu0 0.0
        %991 = vmatprep.subr.mxu0 0.0
        %992 = vmatpush1.msra.mxu0 0.0
        %993 = vmatprep.subr.mxu0 0.0
        %994 = vmatpush1.msra.mxu0 0.0
        %995 = vmatprep.subr.mxu0 0.0
        %996 = vmatpush1.msra.mxu0 0.0
        %997 = vmatprep.subr.mxu0 0.0
        %998 = vmatpush1.msra.mxu0 0.0
        %999 = vmatprep.subr.mxu0 0.0
        %1000 = vmatpush1.msra.mxu0 0.0
        %1001 = vmatprep.subr.mxu0 0.0
        %1002 = vmatpush1.msra.mxu0 0.0
        %1003 = vmatprep.subr.mxu0 0.0
        %1004 = vmatpush1.msra.mxu0 0.0
        %1005 = vmatprep.subr.mxu0 0.0
        %1006 = vmatpush1.msra.mxu0 0.0
        %1007 = vmatprep.subr.mxu0 0.0
        %1008 = vmatpush1.msra.mxu0 0.0
        %1009 = vmatprep.subr.mxu0 0.0
        %1010 = vmatpush1.msra.mxu0 0.0
        %1011 = vmatprep.subr.mxu0 0.0
        %1012 = vmatpush1.msra.mxu0 0.0
        %1013 = vmatprep.subr.mxu0 0.0
        %1014 = vmatpush1.msra.mxu0 0.0
        %1015 = vmatprep.subr.mxu0 0.0
        %1016 = vmatpush1.msra.mxu0 0.0
        %1017 = vmatprep.subr.mxu0 0.0
        %1018 = vmatpush1.msra.mxu0 0.0
        %1019 = vmatprep.subr.mxu0 0.0
        %1020 = vmatpush1.msra.mxu0 0.0
        %1021 = vmatprep.subr.mxu0 0.0
        %1022 = vmatpush1.msra.mxu0 0.0
        %1023 = vmatprep.mubr.f32.mxu0 0.0
        %1024 = vmatmul.mubr.f32.gmra.mrb[0].mxu0 %v957
        %v1025 = vpop.f32.mrb[0].mxu0
        %v1026 = vadd.f32 0.0, %v1025
        %v1027 = vpop.f32.mrb[0].mxu0
        %1028 = vdwg.mxu0
        %v1029 = vrcp.pop %v952
        %v1030 = vmul.f32 %v1026, %v1029
        %1032 = vrot.lane.b32.xlu0 %v1030, 24
        %v1033 = vpop.permute.xlu0 %1032
        %vm1035 = vcmask 261312
        %1036 = vst.msk [vmem:[#allocation3] sm:$0xff] %vm1035, %v1033
        %v1037 = vld [vmem:[#allocation3] sm:$0xff]
        %v1038 = vld [vmem:[#allocation9] sm:$0xff]
        %v1039 = vld [vmem:[#allocation9 + $0x8] sm:$0xff]
        %v1040 = vld [vmem:[#allocation9 + $0x10] sm:$0xff]
        %v1041 = vld [vmem:[#allocation9 + $0x18] sm:$0xff]
        %v1042 = vld [vmem:[%s3] sm:$0x1]
        %v1044 = vlaneseq
        %v1045 = vshrl.u32 %v1044, 7
        %v1046 = vsub.s32 0, %v1045
        %v1047 = vrot.slane %v1042, %v1046
        %vm1049 = vcmask 261120
        %v1051 = vsel %vm1049, %v1037, 0
        %1053 = vmatprep.subr.mxu0 0.0
        %1054 = vmatpush1.msra.mxu0 %v1038
        %1055 = vmatprep.subr.mxu0 0.0
        %1056 = vmatpush1.msra.mxu0 %v1039
        %1057 = vmatprep.subr.mxu0 0.0
        %1058 = vmatpush1.msra.mxu0 %v1040
        %1059 = vmatprep.subr.mxu0 0.0
        %1060 = vmatpush1.msra.mxu0 %v1041
        %1061 = vmatprep.subr.mxu0 0.0
        %1062 = vmatpush1.msra.mxu0 0.0
        %1063 = vmatprep.subr.mxu0 0.0
        %1064 = vmatpush1.msra.mxu0 0.0
        %1065 = vmatprep.subr.mxu0 0.0
        %1066 = vmatpush1.msra.mxu0 0.0
        %1067 = vmatprep.subr.mxu0 0.0
        %1068 = vmatpush1.msra.mxu0 0.0
        %1069 = vmatprep.subr.mxu0 0.0
        %1070 = vmatpush1.msra.mxu0 0.0
        %1071 = vmatprep.subr.mxu0 0.0
        %1072 = vmatpush1.msra.mxu0 0.0
        %1073 = vmatprep.subr.mxu0 0.0
        %1074 = vmatpush1.msra.mxu0 0.0
        %1075 = vmatprep.subr.mxu0 0.0
        %1076 = vmatpush1.msra.mxu0 0.0
        %1077 = vmatprep.subr.mxu0 0.0
        %1078 = vmatpush1.msra.mxu0 0.0
        %1079 = vmatprep.subr.mxu0 0.0
        %1080 = vmatpush1.msra.mxu0 0.0
        %1081 = vmatprep.subr.mxu0 0.0
        %1082 = vmatpush1.msra.mxu0 0.0
        %1083 = vmatprep.subr.mxu0 0.0
        %1084 = vmatpush1.msra.mxu0 0.0
        %1085 = vmatprep.subr.mxu0 0.0
        %1086 = vmatpush1.msra.mxu0 0.0
        %1087 = vmatprep.subr.mxu0 0.0
        %1088 = vmatpush1.msra.mxu0 0.0
        %1089 = vmatprep.subr.mxu0 0.0
        %1090 = vmatpush1.msra.mxu0 0.0
        %1091 = vmatprep.subr.mxu0 0.0
        %1092 = vmatpush1.msra.mxu0 0.0
        %1093 = vmatprep.subr.mxu0 0.0
        %1094 = vmatpush1.msra.mxu0 0.0
        %1095 = vmatprep.subr.mxu0 0.0
        %1096 = vmatpush1.msra.mxu0 0.0
        %1097 = vmatprep.subr.mxu0 0.0
        %1098 = vmatpush1.msra.mxu0 0.0
        %1099 = vmatprep.subr.mxu0 0.0
        %1100 = vmatpush1.msra.mxu0 0.0
        %1101 = vmatprep.subr.mxu0 0.0
        %1102 = vmatpush1.msra.mxu0 0.0
        %1103 = vmatprep.subr.mxu0 0.0
        %1104 = vmatpush1.msra.mxu0 0.0
        %1105 = vmatprep.subr.mxu0 0.0
        %1106 = vmatpush1.msra.mxu0 0.0
        %1107 = vmatprep.subr.mxu0 0.0
        %1108 = vmatpush1.msra.mxu0 0.0
        %1109 = vmatprep.subr.mxu0 0.0
        %1110 = vmatpush1.msra.mxu0 0.0
        %1111 = vmatprep.subr.mxu0 0.0
        %1112 = vmatpush1.msra.mxu0 0.0
        %1113 = vmatprep.subr.mxu0 0.0
        %1114 = vmatpush1.msra.mxu0 0.0
        %1115 = vmatprep.subr.mxu0 0.0
        %1116 = vmatpush1.msra.mxu0 0.0
        %1117 = vmatprep.mubr.f32.mxu0 0.0
        %1118 = vmatmul.mubr.f32.gmra.mrb[0].mxu0 %v1051
        %v1119 = vpop.f32.mrb[0].mxu0
        %v1120 = vadd.f32 %v1047, %v1119
        %v1121 = vpop.f32.mrb[0].mxu0
        %1122 = vdwg.mxu0
        %1123 = vst.msk [vmem:[%s255] sm:$0xff] %vm1049, %v1120
        %s1124 = sand.u32 %s133, 1
        %s1125 = scalar_lea.sflag [#allocation6], %s1124
        %s1126 = sand.u32 %s133, 1
        %s1127 = smul.addr %s1126, 8
        %s1128 = scalar_lea.vmem [#allocation10], %s1127
        // Predicated region
        $region53: #{tpu_custom_call.1} parent=35 // pred_check
          %p1129 = pneg %p143
        $region54: #{tpu_custom_call.1} parent=35 // pred_check_branch
          %1131 = sbr.rel (%p1129) target = $region56
        $region55: #{tpu_custom_call.1} parent=35 // pred_region
          %s1133 = ssub.s32 128, 128
          %1134 = vsyncadd %s1125, %s1133
          %s1135 = sadd.s32 %s27, %s26
          %s1136 = smul.addr %s1135, 128
          %s1137 = scalar_lea.hbm %s4, %s1136
          %s1139 = sshll.u32 %s1128, 4
          %s1140 = int_to_ptr.vmem [resolvable:$true] %s1139
          %1142 = dma.vmem_to_hbm [thread:$0]  %s1140, 128, %s1137, %s1125
        $region56: #{tpu_custom_call.1} parent=35 // pred_fallthru
          _
      $region36: #{tpu_custom_call.1} parent=5 // pred_fallthru
        _
      %p1143 = scmp.le.s32.totalorder 2, %s17
      // Predicated region
      $region57: #{tpu_custom_call.1} parent=5 // pred_check
        %p1144 = pneg %p1143
      $region58: #{tpu_custom_call.1} parent=5 // pred_check_branch
        %1146 = sbr.rel (%p1144) target = $region60
      $region59: #{tpu_custom_call.1} parent=5 // pred_region
        %s1147 = ssub.s32 %s17, 2
        // Predicated region
        $region61: #{tpu_custom_call.1} parent=59 // pred_check
          %p1148 = pneg %p149
        $region62: #{tpu_custom_call.1} parent=59 // pred_check_branch
          %1150 = sbr.rel (%p1148) target = $region64
        $region63: #{tpu_custom_call.1} parent=59 // pred_region
          %s1151 = sand.u32 %s134, 1
          %s1152 = scalar_lea.sflag [#allocation6], %s1151
          %s1153 = sand.u32 %s134, 1
          %s1154 = smul.addr %s1153, 8
          %s1155 = scalar_lea.vmem [#allocation10], %s1154
          %1156 = dma.done %s1152, 128
        $region64: #{tpu_custom_call.1} parent=59 // pred_fallthru
          _
      $region60: #{tpu_custom_call.1} parent=5 // pred_fallthru
        _
    $region6: #{tpu_custom_call.1} parent=1 // loop_footer
      %s21 = sadd.s32 1, %s17
    $region7: #{tpu_custom_call.1} parent=1 // loop_footer_branch
      %16 = sbr.rel target = $region3
    $region8: #{tpu_custom_call.1} parent=1 // loop_exit
      _
    %1157 = vsyncpa [#allocation5], 1
    %s1158 = scalar_lea.sflag [#allocation5], 1
    %1159 = vsyncpa %s1158, 1
    %1160 = vsyncpa [#allocation8], 1
    %1161 = vsyncpa [#allocation6], 1
    %s1162 = scalar_lea.sflag [#allocation6], 1
    %1163 = vsyncpa %s1162, 1

</llo_original>
